<compile_context>
chip_gen: v6e
topology: v6e:2x2x1
jax: 0.10.0
libtpu: 0.0.40
codegen_flags: <defaults>
</compile_context>

<pallas_src>
import jax
import jax.numpy as jnp
from jax.experimental import pallas as pl
from jax.experimental.pallas import tpu as pltpu

H1 = 400
H2 = 300
LN_EPS = 1e-5


def _round_up(x, m):
    return ((x + m - 1) // m) * m


def _layernorm(x, gamma, beta):
    # PyTorch nn.LayerNorm semantics: biased variance over last dim, eps inside rsqrt.
    # One-pass variance (mean(x^2) - mu^2) saves a full-width subtract + lane reduction.
    mu = jnp.mean(x, axis=-1, keepdims=True)
    var = jnp.mean(x * x, axis=-1, keepdims=True) - mu * mu
    xhat = (x - mu) * jax.lax.rsqrt(var + LN_EPS)
    return xhat * gamma + beta


def actor_kernel(x_ref,
                 w1_ref, b1_ref, g1_ref, be1_ref,
                 w2_ref, b2_ref, g2_ref, be2_ref,
                 wp_ref, bp_ref,
                 o_ref):
    mm_dtype = w1_ref.dtype  # matmul operand dtype (f32 or bf16); accumulation is f32

    x = x_ref[...].astype(mm_dtype)

    # fc1 -> LayerNorm(400) -> ReLU   (LN / ReLU math in f32)
    h = jnp.dot(x, w1_ref[...], preferred_element_type=jnp.float32) + b1_ref[...]
    h = _layernorm(h, g1_ref[...], be1_ref[...])
    h = jnp.maximum(h, 0.0)

    # fc2 -> LayerNorm(300) -> ReLU
    h = jnp.dot(h.astype(mm_dtype), w2_ref[...],
                preferred_element_type=jnp.float32) + b2_ref[...]
    h = _layernorm(h, g2_ref[...], be2_ref[...])
    h = jnp.maximum(h, 0.0)

    # policy head (padded to 128 lanes) -> tanh
    a = jnp.dot(h.astype(mm_dtype), wp_ref[...],
                preferred_element_type=jnp.float32) + bp_ref[...]
    o_ref[...] = jnp.tanh(a)


def init_actor_params(key, n_obs, n_actions, dtype=jnp.float32):
    """Deterministic init mirroring the PyTorch module's __init__ ranges."""
    k1w, k1b, k2w, k2b, kpw, kpb = jax.random.split(key, 6)

    # born = 1/sqrt(weight.size()[0]) = 1/sqrt(out_features) per the reference code.
    born1 = 1.0 / jnp.sqrt(jnp.asarray(H1, dtype))
    born2 = 1.0 / jnp.sqrt(jnp.asarray(H2, dtype))

    # Stored as (in_features, out_features) — already transposed for x @ W.
    w1 = jax.random.uniform(k1w, (n_obs, H1), dtype, -born1, born1)
    b1 = jax.random.uniform(k1b, (1, H1), dtype, -born1, born1)
    w2 = jax.random.uniform(k2w, (H1, H2), dtype, -born2, born2)
    b2 = jax.random.uniform(k2b, (1, H2), dtype, -born2, born2)
    wp = jax.random.uniform(kpw, (H2, n_actions), dtype, -0.003, 0.003)
    bp = jax.random.uniform(kpb, (1, n_actions), dtype, -0.003, 0.003)

    # nn.LayerNorm defaults: gamma = 1, beta = 0.
    g1, be1 = jnp.ones((1, H1), dtype), jnp.zeros((1, H1), dtype)
    g2, be2 = jnp.ones((1, H2), dtype), jnp.zeros((1, H2), dtype)

    return dict(w1=w1, b1=b1, g1=g1, be1=be1,
                w2=w2, b2=b2, g2=g2, be2=be2,
                wp=wp, bp=bp)


def actor_forward(state, params, *, matmul_dtype=jnp.float32, block_b=512):
    """Fused Actor forward. `matmul_dtype=jnp.bfloat16` enables the fast MXU path.

    block_b: max batch tile. 512 fits comfortably in every generation's scoped
    VMEM (resident weights < 1 MiB); raise to 2048+ on v6e / 1024-2048 on v7x
    for large-batch throughput.
    """
    state = state.astype(jnp.float32)
    B, n_obs = state.shape
    h1 = params["w1"].shape[1]
    h2 = params["w2"].shape[1]
    n_actions = params["wp"].shape[1]

    # --- lane-dense output: pad policy head to a multiple of 128 lanes ------
    a_pad = max(_round_up(n_actions, 128), 128)
    wp = jnp.pad(params["wp"].astype(matmul_dtype), ((0, 0), (0, a_pad - n_actions)))
    bp = jnp.pad(params["bp"].astype(jnp.float32), ((0, 0), (0, a_pad - n_actions)))

    # Matmul operands in matmul_dtype; LN / bias params stay f32 (VPU math in f32).
    w1 = params["w1"].astype(matmul_dtype)
    w2 = params["w2"].astype(matmul_dtype)
    b1 = params["b1"].astype(jnp.float32)
    b2 = params["b2"].astype(jnp.float32)
    g1 = params["g1"].astype(jnp.float32)
    g2 = params["g2"].astype(jnp.float32)
    be1 = params["be1"].astype(jnp.float32)
    be2 = params["be2"].astype(jnp.float32)

    # --- batch tiling: TB multiple of 8 sublanes, pad B up to a tile multiple
    tb = min(block_b, _round_up(B, 8))
    b_pad = _round_up(B, tb)
    if b_pad != B:
        state = jnp.pad(state, ((0, b_pad - B), (0, 0)))
    grid = (b_pad // tb,)

    const2d = lambda i: (0, 0)  # weights/biases resident across grid steps
    in_specs = [
        pl.BlockSpec((tb, n_obs), lambda i: (i, 0)),   # state tile
        pl.BlockSpec((n_obs, h1), const2d),            # w1
        pl.BlockSpec((1, h1), const2d),                # b1
        pl.BlockSpec((1, h1), const2d),                # g1
        pl.BlockSpec((1, h1), const2d),                # be1
        pl.BlockSpec((h1, h2), const2d),               # w2
        pl.BlockSpec((1, h2), const2d),                # b2
        pl.BlockSpec((1, h2), const2d),                # g2
        pl.BlockSpec((1, h2), const2d),                # be2
        pl.BlockSpec((h2, a_pad), const2d),            # wp (padded)
        pl.BlockSpec((1, a_pad), const2d),             # bp (padded)
    ]
    out_specs = pl.BlockSpec((tb, a_pad), lambda i: (i, 0))

    w_item = jnp.dtype(matmul_dtype).itemsize
    weight_bytes = (n_obs * h1 + h1 * h2 + h2 * a_pad) * w_item \
                   + (3 * h1 + 3 * h2 + a_pad) * 4
    cost = pl.CostEstimate(
        flops=2 * b_pad * (n_obs * h1 + h1 * h2 + h2 * a_pad),
        transcendentals=b_pad * (2 + a_pad),            # 2 rsqrt + tanh per row
        bytes_accessed=weight_bytes + b_pad * (n_obs + a_pad) * 4,
    )

    out = pl.pallas_call(
        actor_kernel,
        out_shape=jax.ShapeDtypeStruct((b_pad, a_pad), jnp.float32),
        grid=grid,
        in_specs=in_specs,
        out_specs=out_specs,
        compiler_params=pltpu.CompilerParams(
            dimension_semantics=("parallel",),          # megacore-shardable on v7x
            vmem_limit_bytes=48 * 1024 * 1024,
        ),
        cost_estimate=cost,
    )(state, w1, b1, g1, be1, w2, b2, g2, be2, wp, bp)

    return out[:B, :n_actions]


def actor_forward_ref(state, p):
    """Pure-JAX reference matching PyTorch semantics (two-pass LN)."""
    def ln(x, g, b):
        mu = jnp.mean(x, axis=-1, keepdims=True)
        var = jnp.mean((x - mu) ** 2, axis=-1, keepdims=True)
        return (x - mu) / jnp.sqrt(var + LN_EPS) * g + b

    h = jnp.maximum(ln(state @ p["w1"] + p["b1"], p["g1"], p["be1"]), 0.0)
    h = jnp.maximum(ln(h @ p["w2"] + p["b2"], p["g2"], p["be2"]), 0.0)
    return jnp.tanh(h @ p["wp"] + p["bp"])


# TODO(synk): the PyTorch module also carries an Adam optimizer; training state
# is out of scope for this forward-pass kernel.

if __name__ == "__main__":
    n_obs, n_actions, batch = 8, 4, 4

    key = jax.random.PRNGKey(0)
    kparam, kstate = jax.random.split(key)
    params = init_actor_params(kparam, n_obs, n_actions)
    state = jax.random.normal(kstate, (batch, n_obs), jnp.float32)

    ref = actor_forward_ref(state, params)

    # f32 MXU path — tight check against the PyTorch-semantics reference.
    out_f32 = actor_forward(state, params, matmul_dtype=jnp.float32)
    jax.block_until_ready(out_f32)
    assert out_f32.shape == (batch, n_actions)
    assert jnp.allclose(out_f32, ref, atol=1e-4, rtol=1e-4), "f32 mismatch vs reference"

    # bf16 MXU path (fast path on v5e/v6e/v7x) — looser tolerance.
    out_bf16 = actor_forward(state, params, matmul_dtype=jnp.bfloat16)
    jax.block_until_ready(out_bf16)
    assert out_bf16.shape == (batch, n_actions)
    assert jnp.allclose(out_bf16, ref, atol=2e-2, rtol=2e-2), "bf16 mismatch vs reference"

    print("KERNEL_OK")
</pallas_src>

<mosaic_0001>
module attributes {stable_mosaic.version = 11 : i64} {
  func.func @actor_kernel(%arg0: i32, %arg1: memref<8x8xf32, #tpu.memory_space<vmem>>, %arg2: memref<8x400xf32, #tpu.memory_space<vmem>>, %arg3: memref<1x400xf32, #tpu.memory_space<vmem>>, %arg4: memref<1x400xf32, #tpu.memory_space<vmem>>, %arg5: memref<1x400xf32, #tpu.memory_space<vmem>>, %arg6: memref<400x300xf32, #tpu.memory_space<vmem>>, %arg7: memref<1x300xf32, #tpu.memory_space<vmem>>, %arg8: memref<1x300xf32, #tpu.memory_space<vmem>>, %arg9: memref<1x300xf32, #tpu.memory_space<vmem>>, %arg10: memref<300x128xf32, #tpu.memory_space<vmem>>, %arg11: memref<1x128xf32, #tpu.memory_space<vmem>>, %arg12: memref<8x128xf32, #tpu.memory_space<vmem>>) attributes {dimension_semantics = [#tpu.dimension_semantics<parallel>], iteration_bounds = array<i64: 1>, scalar_prefetch = 0 : i64, scratch_operands = 0 : i64, tpu.core_type = #tpu.core_type<tc>, window_params = [{transform_indices = @transform_0, window_bounds = array<i64: 8, 8>}, {pipeline_mode = #tpu.pipeline_mode<synchronous>, transform_indices = @transform_1, window_bounds = array<i64: 8, 400>}, {pipeline_mode = #tpu.pipeline_mode<synchronous>, transform_indices = @transform_2, window_bounds = array<i64: 1, 400>}, {pipeline_mode = #tpu.pipeline_mode<synchronous>, transform_indices = @transform_3, window_bounds = array<i64: 1, 400>}, {pipeline_mode = #tpu.pipeline_mode<synchronous>, transform_indices = @transform_4, window_bounds = array<i64: 1, 400>}, {pipeline_mode = #tpu.pipeline_mode<synchronous>, transform_indices = @transform_5, window_bounds = array<i64: 400, 300>}, {pipeline_mode = #tpu.pipeline_mode<synchronous>, transform_indices = @transform_6, window_bounds = array<i64: 1, 300>}, {pipeline_mode = #tpu.pipeline_mode<synchronous>, transform_indices = @transform_7, window_bounds = array<i64: 1, 300>}, {pipeline_mode = #tpu.pipeline_mode<synchronous>, transform_indices = @transform_8, window_bounds = array<i64: 1, 300>}, {pipeline_mode = #tpu.pipeline_mode<synchronous>, transform_indices = @transform_9, window_bounds = array<i64: 300, 128>}, {pipeline_mode = #tpu.pipeline_mode<synchronous>, transform_indices = @transform_10, window_bounds = array<i64: 1, 128>}, {transform_indices = @transform_11, window_bounds = array<i64: 8, 128>}]} {
    %c0 = arith.constant 0 : index
    %c0_0 = arith.constant 0 : index
    %0 = vector.load %arg1[%c0, %c0_0] : memref<8x8xf32, #tpu.memory_space<vmem>>, vector<8x8xf32>
    %c0_1 = arith.constant 0 : index
    %c0_2 = arith.constant 0 : index
    %1 = vector.load %arg2[%c0_1, %c0_2] : memref<8x400xf32, #tpu.memory_space<vmem>>, vector<8x400xf32>
    %cst = arith.constant dense<0.000000e+00> : vector<8x400xf32>
    %2 = tpu.matmul %0, %1, %cst {dimension_numbers = #tpu.dot_dimension_numbers<[1], [0], [0], [1], [0, 0, 1, 1], [], []>} : vector<8x8xf32>, vector<8x400xf32>, vector<8x400xf32> -> vector<8x400xf32>
    %c0_3 = arith.constant 0 : index
    %c0_4 = arith.constant 0 : index
    %3 = vector.load %arg3[%c0_3, %c0_4] : memref<1x400xf32, #tpu.memory_space<vmem>>, vector<1x400xf32>
    %4 = vector.broadcast %3 : vector<1x400xf32> to vector<8x400xf32>
    %5 = arith.addf %2, %4 : vector<8x400xf32>
    %c0_5 = arith.constant 0 : index
    %c0_6 = arith.constant 0 : index
    %6 = vector.load %arg4[%c0_5, %c0_6] : memref<1x400xf32, #tpu.memory_space<vmem>>, vector<1x400xf32>
    %c0_7 = arith.constant 0 : index
    %c0_8 = arith.constant 0 : index
    %7 = vector.load %arg5[%c0_7, %c0_8] : memref<1x400xf32, #tpu.memory_space<vmem>>, vector<1x400xf32>
    %cst_9 = arith.constant dense<0.000000e+00> : vector<8xf32>
    %8 = vector.multi_reduction <add>, %5, %cst_9 [1] : vector<8x400xf32> to vector<8xf32>
    %9 = vector.shape_cast %8 : vector<8xf32> to vector<8x1xf32>
    %cst_10 = arith.constant 4.000000e+02 : f32
    %10 = vector.broadcast %cst_10 : f32 to vector<8x1xf32>
    %11 = arith.divf %9, %10 : vector<8x1xf32>
    %12 = arith.mulf %5, %5 : vector<8x400xf32>
    %cst_11 = arith.constant dense<0.000000e+00> : vector<8xf32>
    %13 = vector.multi_reduction <add>, %12, %cst_11 [1] : vector<8x400xf32> to vector<8xf32>
    %14 = vector.shape_cast %13 : vector<8xf32> to vector<8x1xf32>
    %cst_12 = arith.constant 4.000000e+02 : f32
    %15 = vector.broadcast %cst_12 : f32 to vector<8x1xf32>
    %16 = arith.divf %14, %15 : vector<8x1xf32>
    %17 = arith.mulf %11, %11 : vector<8x1xf32>
    %18 = arith.subf %16, %17 : vector<8x1xf32>
    %19 = vector.broadcast %11 : vector<8x1xf32> to vector<8x400xf32>
    %20 = arith.subf %5, %19 : vector<8x400xf32>
    %cst_13 = arith.constant 9.99999974E-6 : f32
    %21 = vector.broadcast %cst_13 : f32 to vector<8x1xf32>
    %22 = arith.addf %18, %21 : vector<8x1xf32>
    %23 = math.rsqrt %22 : vector<8x1xf32>
    %24 = vector.broadcast %23 : vector<8x1xf32> to vector<8x400xf32>
    %25 = arith.mulf %20, %24 : vector<8x400xf32>
    %26 = vector.broadcast %6 : vector<1x400xf32> to vector<8x400xf32>
    %27 = arith.mulf %25, %26 : vector<8x400xf32>
    %28 = vector.broadcast %7 : vector<1x400xf32> to vector<8x400xf32>
    %29 = arith.addf %27, %28 : vector<8x400xf32>
    %cst_14 = arith.constant 0.000000e+00 : f32
    %30 = vector.broadcast %cst_14 : f32 to vector<8x400xf32>
    %31 = arith.maximumf %29, %30 : vector<8x400xf32>
    %c0_15 = arith.constant 0 : index
    %c0_16 = arith.constant 0 : index
    %32 = vector.load %arg6[%c0_15, %c0_16] : memref<400x300xf32, #tpu.memory_space<vmem>>, vector<400x300xf32>
    %cst_17 = arith.constant dense<0.000000e+00> : vector<8x300xf32>
    %33 = tpu.matmul %31, %32, %cst_17 {dimension_numbers = #tpu.dot_dimension_numbers<[1], [0], [0], [1], [0, 0, 1, 1], [], []>} : vector<8x400xf32>, vector<400x300xf32>, vector<8x300xf32> -> vector<8x300xf32>
    %c0_18 = arith.constant 0 : index
    %c0_19 = arith.constant 0 : index
    %34 = vector.load %arg7[%c0_18, %c0_19] : memref<1x300xf32, #tpu.memory_space<vmem>>, vector<1x300xf32>
    %35 = vector.broadcast %34 : vector<1x300xf32> to vector<8x300xf32>
    %36 = arith.addf %33, %35 : vector<8x300xf32>
    %c0_20 = arith.constant 0 : index
    %c0_21 = arith.constant 0 : index
    %37 = vector.load %arg8[%c0_20, %c0_21] : memref<1x300xf32, #tpu.memory_space<vmem>>, vector<1x300xf32>
    %c0_22 = arith.constant 0 : index
    %c0_23 = arith.constant 0 : index
    %38 = vector.load %arg9[%c0_22, %c0_23] : memref<1x300xf32, #tpu.memory_space<vmem>>, vector<1x300xf32>
    %cst_24 = arith.constant dense<0.000000e+00> : vector<8xf32>
    %39 = vector.multi_reduction <add>, %36, %cst_24 [1] : vector<8x300xf32> to vector<8xf32>
    %40 = vector.shape_cast %39 : vector<8xf32> to vector<8x1xf32>
    %cst_25 = arith.constant 3.000000e+02 : f32
    %41 = vector.broadcast %cst_25 : f32 to vector<8x1xf32>
    %42 = arith.divf %40, %41 : vector<8x1xf32>
    %43 = arith.mulf %36, %36 : vector<8x300xf32>
    %cst_26 = arith.constant dense<0.000000e+00> : vector<8xf32>
    %44 = vector.multi_reduction <add>, %43, %cst_26 [1] : vector<8x300xf32> to vector<8xf32>
    %45 = vector.shape_cast %44 : vector<8xf32> to vector<8x1xf32>
    %cst_27 = arith.constant 3.000000e+02 : f32
    %46 = vector.broadcast %cst_27 : f32 to vector<8x1xf32>
    %47 = arith.divf %45, %46 : vector<8x1xf32>
    %48 = arith.mulf %42, %42 : vector<8x1xf32>
    %49 = arith.subf %47, %48 : vector<8x1xf32>
    %50 = vector.broadcast %42 : vector<8x1xf32> to vector<8x300xf32>
    %51 = arith.subf %36, %50 : vector<8x300xf32>
    %cst_28 = arith.constant 9.99999974E-6 : f32
    %52 = vector.broadcast %cst_28 : f32 to vector<8x1xf32>
    %53 = arith.addf %49, %52 : vector<8x1xf32>
    %54 = math.rsqrt %53 : vector<8x1xf32>
    %55 = vector.broadcast %54 : vector<8x1xf32> to vector<8x300xf32>
    %56 = arith.mulf %51, %55 : vector<8x300xf32>
    %57 = vector.broadcast %37 : vector<1x300xf32> to vector<8x300xf32>
    %58 = arith.mulf %56, %57 : vector<8x300xf32>
    %59 = vector.broadcast %38 : vector<1x300xf32> to vector<8x300xf32>
    %60 = arith.addf %58, %59 : vector<8x300xf32>
    %cst_29 = arith.constant 0.000000e+00 : f32
    %61 = vector.broadcast %cst_29 : f32 to vector<8x300xf32>
    %62 = arith.maximumf %60, %61 : vector<8x300xf32>
    %c0_30 = arith.constant 0 : index
    %c0_31 = arith.constant 0 : index
    %63 = vector.load %arg10[%c0_30, %c0_31] : memref<300x128xf32, #tpu.memory_space<vmem>>, vector<300x128xf32>
    %cst_32 = arith.constant dense<0.000000e+00> : vector<8x128xf32>
    %64 = tpu.matmul %62, %63, %cst_32 {dimension_numbers = #tpu.dot_dimension_numbers<[1], [0], [0], [1], [0, 0, 1, 1], [], []>} : vector<8x300xf32>, vector<300x128xf32>, vector<8x128xf32> -> vector<8x128xf32>
    %c0_33 = arith.constant 0 : index
    %c0_34 = arith.constant 0 : index
    %65 = vector.load %arg11[%c0_33, %c0_34] : memref<1x128xf32, #tpu.memory_space<vmem>>, vector<1x128xf32>
    %66 = vector.broadcast %65 : vector<1x128xf32> to vector<8x128xf32>
    %67 = arith.addf %64, %66 : vector<8x128xf32>
    %68 = math.tanh %67 : vector<8x128xf32>
    %c0_35 = arith.constant 0 : index
    %c0_36 = arith.constant 0 : index
    %69 = vector.load %arg12[%c0_35, %c0_36] : memref<8x128xf32, #tpu.memory_space<vmem>>, vector<8x128xf32>
    tpu.vector_store %arg12[%c0_35, %c0_36], %68 {strides = array<i32>} : memref<8x128xf32, #tpu.memory_space<vmem>>, vector<8x128xf32>,
    return
  }
  func.func @transform_0(%arg0: i32) -> (i32, i32) {
    %c0_i32 = arith.constant 0 : i32
    %c0_i32_0 = arith.constant 0 : i32
    return %arg0, %c0_i32 : i32, i32
  }
  func.func @transform_1(%arg0: i32) -> (i32, i32) {
    %c0_i32 = arith.constant 0 : i32
    %c0_i32_0 = arith.constant 0 : i32
    %c0_i32_1 = arith.constant 0 : i32
    return %c0_i32, %c0_i32_0 : i32, i32
  }
  func.func @transform_2(%arg0: i32) -> (i32, i32) {
    %c0_i32 = arith.constant 0 : i32
    %c0_i32_0 = arith.constant 0 : i32
    %c0_i32_1 = arith.constant 0 : i32
    return %c0_i32, %c0_i32_0 : i32, i32
  }
  func.func @transform_3(%arg0: i32) -> (i32, i32) {
    %c0_i32 = arith.constant 0 : i32
    %c0_i32_0 = arith.constant 0 : i32
    %c0_i32_1 = arith.constant 0 : i32
    return %c0_i32, %c0_i32_0 : i32, i32
  }
  func.func @transform_4(%arg0: i32) -> (i32, i32) {
    %c0_i32 = arith.constant 0 : i32
    %c0_i32_0 = arith.constant 0 : i32
    %c0_i32_1 = arith.constant 0 : i32
    return %c0_i32, %c0_i32_0 : i32, i32
  }
  func.func @transform_5(%arg0: i32) -> (i32, i32) {
    %c0_i32 = arith.constant 0 : i32
    %c0_i32_0 = arith.constant 0 : i32
    %c0_i32_1 = arith.constant 0 : i32
    return %c0_i32, %c0_i32_0 : i32, i32
  }
  func.func @transform_6(%arg0: i32) -> (i32, i32) {
    %c0_i32 = arith.constant 0 : i32
    %c0_i32_0 = arith.constant 0 : i32
    %c0_i32_1 = arith.constant 0 : i32
    return %c0_i32, %c0_i32_0 : i32, i32
  }
  func.func @transform_7(%arg0: i32) -> (i32, i32) {
    %c0_i32 = arith.constant 0 : i32
    %c0_i32_0 = arith.constant 0 : i32
    %c0_i32_1 = arith.constant 0 : i32
    return %c0_i32, %c0_i32_0 : i32, i32
  }
  func.func @transform_8(%arg0: i32) -> (i32, i32) {
    %c0_i32 = arith.constant 0 : i32
    %c0_i32_0 = arith.constant 0 : i32
    %c0_i32_1 = arith.constant 0 : i32
    return %c0_i32, %c0_i32_0 : i32, i32
  }
  func.func @transform_9(%arg0: i32) -> (i32, i32) {
    %c0_i32 = arith.constant 0 : i32
    %c0_i32_0 = arith.constant 0 : i32
    %c0_i32_1 = arith.constant 0 : i32
    return %c0_i32, %c0_i32_0 : i32, i32
  }
  func.func @transform_10(%arg0: i32) -> (i32, i32) {
    %c0_i32 = arith.constant 0 : i32
    %c0_i32_0 = arith.constant 0 : i32
    %c0_i32_1 = arith.constant 0 : i32
    return %c0_i32, %c0_i32_0 : i32, i32
  }
  func.func @transform_11(%arg0: i32) -> (i32, i32) {
    %c0_i32 = arith.constant 0 : i32
    %c0_i32_0 = arith.constant 0 : i32
    return %arg0, %c0_i32 : i32, i32
  }
}

</mosaic_0001>

<llo_original>
// kernel: tpu_custom_call.1
$region0: #{tpu_custom_call.1}
  #allocation0 [shape = 'u32[]', space=smem, size = 0x4, offset = 0x4, fixed_abs, tag = 'smem constant byte address 0x4 - core index']
  #allocation1 [shape = 'u32[144,128]{1,0:T(1,128)}', space=vmem, size = 0x12000, scoped, tag = 'internal scratch']
  %s0 = inlined_call_operand.hbm [shape: f32[8,8], index: 0, kind: input, shape index: {}]
  %s1 = inlined_call_operand.hbm [shape: f32[8,400], index: 1, kind: input, shape index: {}]
  %s2 = inlined_call_operand.hbm [shape: f32[1,400], index: 2, kind: input, shape index: {}]
  %s3 = inlined_call_operand.vmem [shape: f32[1,400], index: 3, kind: input, shape index: {}]
  %s4 = inlined_call_operand.hbm [shape: f32[1,400], index: 4, kind: input, shape index: {}]
  %s5 = inlined_call_operand.hbm [shape: f32[400,300], index: 5, kind: input, shape index: {}]
  %s6 = inlined_call_operand.vmem [shape: f32[1,300], index: 6, kind: input, shape index: {}]
  %s7 = inlined_call_operand.vmem [shape: f32[1,300], index: 7, kind: input, shape index: {}]
  %s8 = inlined_call_operand.vmem [shape: f32[1,300], index: 8, kind: input, shape index: {}]
  %s9 = inlined_call_operand.hbm [shape: f32[300,128], index: 9, kind: input, shape index: {}]
  %s10 = inlined_call_operand.vmem [shape: f32[1,128], index: 10, kind: input, shape index: {}]
  %s11 = inlined_call_operand.hbm [shape: f32[8,128], index: 11, kind: output, shape index: {}]
  %s12 = sld [smem:[#allocation0]]
  $region78: #{tpu_custom_call.1} parent=0
    _
  %s14 = ssub.s32 1, %s12
  %s15 = scalar_select 0, %s14, %s12
  $region1: #{tpu_custom_call.1} parent=0
    #allocation2 [shape = 'u8[4096]{0}', space=vmem, size = 0x1000, scoped, tag = 'input window, operand 0, single buffered']
    #allocation3 [shape = 's32[1]{0}', space=sflag, size = 0x4, scoped, tag = 'scoped memory for tpu_custom_call.1']
    #allocation4 [shape = 's32[1]{0}', space=sflag, size = 0x4, scoped, tag = 'scoped memory for tpu_custom_call.1']
    #allocation5 [shape = 'u8[16384]{0}', space=vmem, size = 0x4000, scoped, tag = 'input window, operand 1, single buffered']
    #allocation6 [shape = 's32[1]{0}', space=sflag, size = 0x4, scoped, tag = 'scoped memory for tpu_custom_call.1']
    #allocation7 [shape = 'u8[2048]{0}', space=vmem, size = 0x800, scoped, tag = 'input window, operand 2, single buffered']
    #allocation8 [shape = 'u8[2048]{0}', space=vmem, size = 0x800, scoped, tag = 'input window, operand 4, single buffered']
    #allocation9 [shape = 's32[1]{0}', space=sflag, size = 0x4, scoped, tag = 'scoped memory for tpu_custom_call.1']
    #allocation10 [shape = 'u8[614400]{0}', space=vmem, size = 0x96000, scoped, tag = 'input window, operand 5, single buffered']
    #allocation11 [shape = 'u8[155648]{0}', space=vmem, size = 0x26000, scoped, tag = 'input window, operand 9, single buffered']
    #allocation12 [shape = 's32[1]{0}', space=sflag, size = 0x4, scoped, tag = 'scoped memory for tpu_custom_call.1']
    #allocation13 [shape = 'u8[4096]{0}', space=vmem, size = 0x1000, scoped, tag = 'output window, operand 0, single buffered']
    %16 = vsyncpa [#allocation3], 0
    %17 = vsyncpa [#allocation6], 0
    %18 = vsyncpa [#allocation9], 0
    %19 = vsyncpa [#allocation12], 0
    %20 = vsyncpa [#allocation4], 0
    // Predicated region
    $region2: #{tpu_custom_call.1} parent=1 // pred_check
      _
    $region3: #{tpu_custom_call.1} parent=1 // pred_check_branch
      %22 = sbr.rel (0) target = $region5
    $region4: #{tpu_custom_call.1} parent=1 // pred_region
      %s24 = ssub.s32 128, 128
      %25 = vsyncadd [#allocation3], %s24
      %s27 = sshll.u32 [#allocation2], 4
      %s28 = int_to_ptr.vmem [resolvable:$true] %s27
      %30 = dma.hbm_to_vmem [thread:$0]  %s0, 128, %s28, [#allocation3]
    $region5: #{tpu_custom_call.1} parent=1 // pred_fallthru
      _
    // Predicated region
    $region6: #{tpu_custom_call.1} parent=1 // pred_check
      _
    $region7: #{tpu_custom_call.1} parent=1 // pred_check_branch
      %32 = sbr.rel (0) target = $region9
    $region8: #{tpu_custom_call.1} parent=1 // pred_region
      %s34 = ssub.s32 512, 512
      %35 = vsyncadd [#allocation6], %s34
      %s37 = sshll.u32 [#allocation5], 4
      %s38 = int_to_ptr.vmem [resolvable:$true] %s37
      %40 = dma.hbm_to_vmem [thread:$0]  %s1, 512, %s38, [#allocation6]
    $region9: #{tpu_custom_call.1} parent=1 // pred_fallthru
      _
    // Predicated region
    $region10: #{tpu_custom_call.1} parent=1 // pred_check
      _
    $region11: #{tpu_custom_call.1} parent=1 // pred_check_branch
      %42 = sbr.rel (0) target = $region13
    $region12: #{tpu_custom_call.1} parent=1 // pred_region
      %s44 = ssub.s32 64, 64
      %45 = vsyncadd [#allocation6], %s44
      %s47 = sshll.u32 [#allocation7], 4
      %s48 = int_to_ptr.vmem [resolvable:$true] %s47
      %50 = dma.hbm_to_vmem [thread:$0]  %s2, 64, %s48, [#allocation6]
    $region13: #{tpu_custom_call.1} parent=1 // pred_fallthru
      _
    // Predicated region
    $region14: #{tpu_custom_call.1} parent=1 // pred_check
      _
    $region15: #{tpu_custom_call.1} parent=1 // pred_check_branch
      %52 = sbr.rel (0) target = $region17
    $region16: #{tpu_custom_call.1} parent=1 // pred_region
      _
    $region17: #{tpu_custom_call.1} parent=1 // pred_fallthru
      _
    // Predicated region
    $region18: #{tpu_custom_call.1} parent=1 // pred_check
      _
    $region19: #{tpu_custom_call.1} parent=1 // pred_check_branch
      %54 = sbr.rel (0) target = $region21
    $region20: #{tpu_custom_call.1} parent=1 // pred_region
      %s56 = ssub.s32 64, 64
      %57 = vsyncadd [#allocation9], %s56
      %s59 = sshll.u32 [#allocation8], 4
      %s60 = int_to_ptr.vmem [resolvable:$true] %s59
      %62 = dma.hbm_to_vmem [thread:$0]  %s4, 64, %s60, [#allocation9]
    $region21: #{tpu_custom_call.1} parent=1 // pred_fallthru
      _
    // Predicated region
    $region22: #{tpu_custom_call.1} parent=1 // pred_check
      _
    $region23: #{tpu_custom_call.1} parent=1 // pred_check_branch
      %64 = sbr.rel (0) target = $region25
    $region24: #{tpu_custom_call.1} parent=1 // pred_region
      %s66 = ssub.s32 19200, 19200
      %67 = vsyncadd [#allocation9], %s66
      %s68 = sshll.u32 [#allocation10], 4
      %s69 = int_to_ptr.vmem [resolvable:$true] %s68
      %74 = dma.hbm_to_vmem [thread:$0]  %s5, 19200, %s69, [#allocation9], 384, 384, 24
    $region25: #{tpu_custom_call.1} parent=1 // pred_fallthru
      _
    // Predicated region
    $region26: #{tpu_custom_call.1} parent=1 // pred_check
      _
    $region27: #{tpu_custom_call.1} parent=1 // pred_check_branch
      %76 = sbr.rel (0) target = $region29
    $region28: #{tpu_custom_call.1} parent=1 // pred_region
      _
    $region29: #{tpu_custom_call.1} parent=1 // pred_fallthru
      _
    // Predicated region
    $region30: #{tpu_custom_call.1} parent=1 // pred_check
      _
    $region31: #{tpu_custom_call.1} parent=1 // pred_check_branch
      %78 = sbr.rel (0) target = $region33
    $region32: #{tpu_custom_call.1} parent=1 // pred_region
      _
    $region33: #{tpu_custom_call.1} parent=1 // pred_fallthru
      _
    // Predicated region
    $region34: #{tpu_custom_call.1} parent=1 // pred_check
      _
    $region35: #{tpu_custom_call.1} parent=1 // pred_check_branch
      %80 = sbr.rel (0) target = $region37
    $region36: #{tpu_custom_call.1} parent=1 // pred_region
      _
    $region37: #{tpu_custom_call.1} parent=1 // pred_fallthru
      _
    // Predicated region
    $region38: #{tpu_custom_call.1} parent=1 // pred_check
      _
    $region39: #{tpu_custom_call.1} parent=1 // pred_check_branch
      %82 = sbr.rel (0) target = $region41
    $region40: #{tpu_custom_call.1} parent=1 // pred_region
      %s84 = ssub.s32 4864, 4864
      %85 = vsyncadd [#allocation12], %s84
      %s86 = sshll.u32 [#allocation11], 4
      %s87 = int_to_ptr.vmem [resolvable:$true] %s86
      %92 = dma.hbm_to_vmem [thread:$0]  %s9, 4864, %s87, [#allocation12], 128, 128, 8
    $region41: #{tpu_custom_call.1} parent=1 // pred_fallthru
      _
    // Predicated region
    $region42: #{tpu_custom_call.1} parent=1 // pred_check
      _
    $region43: #{tpu_custom_call.1} parent=1 // pred_check_branch
      %94 = sbr.rel (0) target = $region45
    $region44: #{tpu_custom_call.1} parent=1 // pred_region
      _
    $region45: #{tpu_custom_call.1} parent=1 // pred_fallthru
      _
    // Predicated region
    $region46: #{tpu_custom_call.1} parent=1 // pred_check
      _
    $region47: #{tpu_custom_call.1} parent=1 // pred_check_branch
      %96 = sbr.rel (0) target = $region49
    $region48: #{tpu_custom_call.1} parent=1 // pred_region
      %97 = dma.done [#allocation3], 128
    $region49: #{tpu_custom_call.1} parent=1 // pred_fallthru
      _
    // Predicated region
    $region50: #{tpu_custom_call.1} parent=1 // pred_check
      _
    $region51: #{tpu_custom_call.1} parent=1 // pred_check_branch
      %99 = sbr.rel (0) target = $region53
    $region52: #{tpu_custom_call.1} parent=1 // pred_region
      %100 = dma.done [#allocation6], 512
    $region53: #{tpu_custom_call.1} parent=1 // pred_fallthru
      _
    // Predicated region
    $region54: #{tpu_custom_call.1} parent=1 // pred_check
      _
    $region55: #{tpu_custom_call.1} parent=1 // pred_check_branch
      %102 = sbr.rel (0) target = $region57
    $region56: #{tpu_custom_call.1} parent=1 // pred_region
      %103 = dma.done [#allocation6], 64
    $region57: #{tpu_custom_call.1} parent=1 // pred_fallthru
      _
    // Predicated region
    $region58: #{tpu_custom_call.1} parent=1 // pred_check
      _
    $region59: #{tpu_custom_call.1} parent=1 // pred_check_branch
      %105 = sbr.rel (0) target = $region61
    $region60: #{tpu_custom_call.1} parent=1 // pred_region
      %106 = dma.done [#allocation9], 64
    $region61: #{tpu_custom_call.1} parent=1 // pred_fallthru
      _
    // Predicated region
    $region62: #{tpu_custom_call.1} parent=1 // pred_check
      _
    $region63: #{tpu_custom_call.1} parent=1 // pred_check_branch
      %108 = sbr.rel (0) target = $region65
    $region64: #{tpu_custom_call.1} parent=1 // pred_region
      %109 = dma.done [#allocation9], 19200
    $region65: #{tpu_custom_call.1} parent=1 // pred_fallthru
      _
    // Predicated region
    $region66: #{tpu_custom_call.1} parent=1 // pred_check
      _
    $region67: #{tpu_custom_call.1} parent=1 // pred_check_branch
      %111 = sbr.rel (0) target = $region69
    $region68: #{tpu_custom_call.1} parent=1 // pred_region
      %112 = dma.done [#allocation12], 4864
    $region69: #{tpu_custom_call.1} parent=1 // pred_fallthru
      _
    %v113 = vld [vmem:[#allocation2] sm:$0xff]
    %v114 = vld [vmem:[#allocation5] sm:$0xff]
    %v115 = vld [vmem:[#allocation5 + $0x8] sm:$0xff]
    %v116 = vld [vmem:[#allocation5 + $0x10] sm:$0xff]
    %v117 = vld [vmem:[#allocation5 + $0x18] sm:$0xff]
    %v118 = vld [vmem:[#allocation7] sm:$0xf]
    %v120 = vlaneseq
    %v121 = vshrl.u32 %v120, 7
    %v122 = vsub.s32 0, %v121
    %v123 = vrot.slane %v118, %v122
    %v124 = vlaneseq
    %v125 = vshrl.u32 %v124, 7
    %v126 = vsub.s32 1, %v125
    %v127 = vrot.slane %v118, %v126
    %v128 = vlaneseq
    %v129 = vshrl.u32 %v128, 7
    %v130 = vsub.s32 2, %v129
    %v131 = vrot.slane %v118, %v130
    %v132 = vlaneseq
    %v133 = vshrl.u32 %v132, 7
    %v134 = vsub.s32 3, %v133
    %v135 = vrot.slane %v118, %v134
    %vm140 = vcmask 64512
    %v142 = vsel %vm140, %v113, 0
    %144 = vmatprep.subr.mxu0 0.0
    %145 = vmatpush1.msra.mxu0 0.0
    %146 = vmatprep.subr.mxu0 0.0
    %147 = vmatpush1.msra.mxu0 0.0
    %148 = vmatprep.subr.mxu0 0.0
    %149 = vmatpush1.msra.mxu0 0.0
    %150 = vmatprep.subr.mxu0 0.0
    %151 = vmatpush1.msra.mxu0 0.0
    %152 = vmatprep.subr.mxu0 0.0
    %153 = vmatpush1.msra.mxu0 0.0
    %154 = vmatprep.subr.mxu0 0.0
    %155 = vmatpush1.msra.mxu0 0.0
    %156 = vmatprep.subr.mxu0 0.0
    %157 = vmatpush1.msra.mxu0 0.0
    %158 = vmatprep.subr.mxu0 0.0
    %159 = vmatpush1.msra.mxu0 0.0
    %160 = vmatprep.subr.mxu0 0.0
    %161 = vmatpush1.msra.mxu0 0.0
    %162 = vmatprep.subr.mxu0 0.0
    %163 = vmatpush1.msra.mxu0 0.0
    %164 = vmatprep.subr.mxu0 0.0
    %165 = vmatpush1.msra.mxu0 0.0
    %166 = vmatprep.subr.mxu0 0.0
    %167 = vmatpush1.msra.mxu0 0.0
    %168 = vmatprep.subr.mxu0 0.0
    %169 = vmatpush1.msra.mxu0 0.0
    %170 = vmatprep.subr.mxu0 0.0
    %171 = vmatpush1.msra.mxu0 0.0
    %172 = vmatprep.subr.mxu0 0.0
    %173 = vmatpush1.msra.mxu0 0.0
    %174 = vmatprep.subr.mxu0 %v115
    %175 = vmatpush1.msra.mxu0 %v114
    %176 = vmatprep.subr.mxu0 0.0
    %177 = vmatpush2.msra.mxu0 0.0
    %178 = vmatprep.subr.mxu0 0.0
    %179 = vmatpush2.msra.mxu0 0.0
    %180 = vmatprep.subr.mxu0 0.0
    %181 = vmatpush2.msra.mxu0 0.0
    %182 = vmatprep.subr.mxu0 0.0
    %183 = vmatpush2.msra.mxu0 0.0
    %184 = vmatprep.subr.mxu0 0.0
    %185 = vmatpush2.msra.mxu0 0.0
    %186 = vmatprep.subr.mxu0 0.0
    %187 = vmatpush2.msra.mxu0 0.0
    %188 = vmatprep.subr.mxu0 0.0
    %189 = vmatpush2.msra.mxu0 0.0
    %190 = vmatprep.subr.mxu0 0.0
    %191 = vmatpush2.msra.mxu0 0.0
    %192 = vmatprep.subr.mxu0 0.0
    %193 = vmatpush2.msra.mxu0 0.0
    %194 = vmatprep.subr.mxu0 0.0
    %195 = vmatpush2.msra.mxu0 0.0
    %196 = vmatprep.subr.mxu0 0.0
    %197 = vmatpush2.msra.mxu0 0.0
    %198 = vmatprep.subr.mxu0 0.0
    %199 = vmatpush2.msra.mxu0 0.0
    %200 = vmatprep.subr.mxu0 0.0
    %201 = vmatpush2.msra.mxu0 0.0
    %202 = vmatprep.subr.mxu0 0.0
    %203 = vmatpush2.msra.mxu0 0.0
    %204 = vmatprep.subr.mxu0 0.0
    %205 = vmatpush2.msra.mxu0 0.0
    %206 = vmatprep.subr.mxu0 0.0
    %207 = vmatpush2.msra.mxu0 0.0
    %208 = vmatprep.mubr.f32.mxu0 0.0
    %209 = vmatmul.mubr.f32.gmra.mxu0 %v142
    %v210 = vpop.f32.mrf.mxu0
    %v211 = vadd.f32 %v123, %v210
    %v212 = vpop.f32.mrf.mxu0
    %v213 = vadd.f32 %v127, %v212
    %214 = vdwg.mxu0
    %215 = vmatprep.subr.mxu0 0.0
    %216 = vmatpush1.msra.mxu0 0.0
    %217 = vmatprep.subr.mxu0 0.0
    %218 = vmatpush1.msra.mxu0 0.0
    %219 = vmatprep.subr.mxu0 0.0
    %220 = vmatpush1.msra.mxu0 0.0
    %221 = vmatprep.subr.mxu0 0.0
    %222 = vmatpush1.msra.mxu0 0.0
    %223 = vmatprep.subr.mxu0 0.0
    %224 = vmatpush1.msra.mxu0 0.0
    %225 = vmatprep.subr.mxu0 0.0
    %226 = vmatpush1.msra.mxu0 0.0
    %227 = vmatprep.subr.mxu0 0.0
    %228 = vmatpush1.msra.mxu0 0.0
    %229 = vmatprep.subr.mxu0 0.0
    %230 = vmatpush1.msra.mxu0 0.0
    %231 = vmatprep.subr.mxu0 0.0
    %232 = vmatpush1.msra.mxu0 0.0
    %233 = vmatprep.subr.mxu0 0.0
    %234 = vmatpush1.msra.mxu0 0.0
    %235 = vmatprep.subr.mxu0 0.0
    %236 = vmatpush1.msra.mxu0 0.0
    %237 = vmatprep.subr.mxu0 0.0
    %238 = vmatpush1.msra.mxu0 0.0
    %239 = vmatprep.subr.mxu0 0.0
    %240 = vmatpush1.msra.mxu0 0.0
    %241 = vmatprep.subr.mxu0 0.0
    %242 = vmatpush1.msra.mxu0 0.0
    %243 = vmatprep.subr.mxu0 0.0
    %244 = vmatpush1.msra.mxu0 0.0
    %245 = vmatprep.subr.mxu0 %v117
    %246 = vmatpush1.msra.mxu0 %v116
    %247 = vmatprep.subr.mxu0 0.0
    %248 = vmatpush2.msra.mxu0 0.0
    %249 = vmatprep.subr.mxu0 0.0
    %250 = vmatpush2.msra.mxu0 0.0
    %251 = vmatprep.subr.mxu0 0.0
    %252 = vmatpush2.msra.mxu0 0.0
    %253 = vmatprep.subr.mxu0 0.0
    %254 = vmatpush2.msra.mxu0 0.0
    %255 = vmatprep.subr.mxu0 0.0
    %256 = vmatpush2.msra.mxu0 0.0
    %257 = vmatprep.subr.mxu0 0.0
    %258 = vmatpush2.msra.mxu0 0.0
    %259 = vmatprep.subr.mxu0 0.0
    %260 = vmatpush2.msra.mxu0 0.0
    %261 = vmatprep.subr.mxu0 0.0
    %262 = vmatpush2.msra.mxu0 0.0
    %263 = vmatprep.subr.mxu0 0.0
    %264 = vmatpush2.msra.mxu0 0.0
    %265 = vmatprep.subr.mxu0 0.0
    %266 = vmatpush2.msra.mxu0 0.0
    %267 = vmatprep.subr.mxu0 0.0
    %268 = vmatpush2.msra.mxu0 0.0
    %269 = vmatprep.subr.mxu0 0.0
    %270 = vmatpush2.msra.mxu0 0.0
    %271 = vmatprep.subr.mxu0 0.0
    %272 = vmatpush2.msra.mxu0 0.0
    %273 = vmatprep.subr.mxu0 0.0
    %274 = vmatpush2.msra.mxu0 0.0
    %275 = vmatprep.subr.mxu0 0.0
    %276 = vmatpush2.msra.mxu0 0.0
    %277 = vmatprep.subr.mxu0 0.0
    %278 = vmatpush2.msra.mxu0 0.0
    %279 = vmatprep.mubr.f32.mxu0 0.0
    %280 = vmatmul.mubr.f32.gmra.mxu0 %v142
    %v281 = vpop.f32.mrf.mxu0
    %v282 = vadd.f32 %v131, %v281
    %v283 = vpop.f32.mrf.mxu0
    %v284 = vadd.f32 %v135, %v283
    %285 = vdwg.mxu0
    %v286 = vld [vmem:[%s3] sm:$0xf]
    %v287 = vld [vmem:[#allocation8] sm:$0xf]
    %v288 = vadd.f32 %v211, %v213
    %v289 = vadd.f32 %v288, %v282
    %vm290 = vcmask 130048
    %v291 = vsel %vm290, %v284, 0.0
    %v292 = vadd.f32 %v289, %v291
    %293 = vadd.xlane.f32.xlu0 %v292
    %v294 = vpop.xlane.xlu0 %293
    %v295 = vrcp.pop 400.0
    %v296 = vmul.f32 %v294, %v295
    %v297 = vmul.f32 %v211, %v211
    %v298 = vmul.f32 %v213, %v213
    %v299 = vmul.f32 %v282, %v282
    %v300 = vmul.f32 %v284, %v284
    %v301 = vadd.f32 %v297, %v298
    %v302 = vadd.f32 %v301, %v299
    %v303 = vsel %vm290, %v300, 0.0
    %v304 = vadd.f32 %v302, %v303
    %305 = vadd.xlane.f32.xlu0 %v304
    %v306 = vpop.xlane.xlu0 %305
    %v307 = vmul.f32 %v306, %v295
    %v308 = vmul.f32 %v296, %v296
    %v309 = vsub.f32 %v307, %v308
    %v310 = vsub.f32 %v211, %v296
    %v311 = vsub.f32 %v213, %v296
    %v312 = vsub.f32 %v282, %v296
    %v313 = vsub.f32 %v284, %v296
    %v314 = vadd.f32 %v309, 1e-05
    %v315 = vrsqrt.pop %v314
    %v316 = vmul.f32 %v310, %v315
    %v317 = vmul.f32 %v311, %v315
    %v318 = vmul.f32 %v312, %v315
    %v319 = vmul.f32 %v313, %v315
    %v321 = vlaneseq
    %v322 = vshrl.u32 %v321, 7
    %v323 = vsub.s32 0, %v322
    %v324 = vrot.slane %v286, %v323
    %v325 = vlaneseq
    %v326 = vshrl.u32 %v325, 7
    %v327 = vsub.s32 1, %v326
    %v328 = vrot.slane %v286, %v327
    %v329 = vlaneseq
    %v330 = vshrl.u32 %v329, 7
    %v331 = vsub.s32 2, %v330
    %v332 = vrot.slane %v286, %v331
    %v333 = vlaneseq
    %v334 = vshrl.u32 %v333, 7
    %v335 = vsub.s32 3, %v334
    %v336 = vrot.slane %v286, %v335
    %v341 = vmul.f32 %v316, %v324
    %v342 = vmul.f32 %v317, %v328
    %v343 = vmul.f32 %v318, %v332
    %v344 = vmul.f32 %v319, %v336
    %v346 = vlaneseq
    %v347 = vshrl.u32 %v346, 7
    %v348 = vsub.s32 0, %v347
    %v349 = vrot.slane %v287, %v348
    %v350 = vlaneseq
    %v351 = vshrl.u32 %v350, 7
    %v352 = vsub.s32 1, %v351
    %v353 = vrot.slane %v287, %v352
    %v354 = vlaneseq
    %v355 = vshrl.u32 %v354, 7
    %v356 = vsub.s32 2, %v355
    %v357 = vrot.slane %v287, %v356
    %v358 = vlaneseq
    %v359 = vshrl.u32 %v358, 7
    %v360 = vsub.s32 3, %v359
    %v361 = vrot.slane %v287, %v360
    %v366 = vadd.f32 %v341, %v349
    %v367 = vadd.f32 %v342, %v353
    %v368 = vadd.f32 %v343, %v357
    %v369 = vadd.f32 %v344, %v361
    %v370 = vmax.f32 %v366, 0.0
    %v371 = vmax.f32 %v367, 0.0
    %v372 = vmax.f32 %v368, 0.0
    %v373 = vmax.f32 %v369, 0.0
    %v374 = vld [vmem:[#allocation10] sm:$0xff]
    %v375 = vld [vmem:[#allocation10 + $0x8] sm:$0xff]
    %v376 = vld [vmem:[#allocation10 + $0x10] sm:$0xff]
    %v377 = vld [vmem:[#allocation10 + $0x18] sm:$0xff]
    %v378 = vld [vmem:[#allocation10 + $0x20] sm:$0xff]
    %v379 = vld [vmem:[#allocation10 + $0x28] sm:$0xff]
    %v380 = vld [vmem:[#allocation10 + $0x30] sm:$0xff]
    %v381 = vld [vmem:[#allocation10 + $0x38] sm:$0xff]
    %v382 = vld [vmem:[#allocation10 + $0x40] sm:$0xff]
    %v383 = vld [vmem:[#allocation10 + $0x48] sm:$0xff]
    %v384 = vld [vmem:[#allocation10 + $0x50] sm:$0xff]
    %v385 = vld [vmem:[#allocation10 + $0x58] sm:$0xff]
    %v386 = vld [vmem:[#allocation10 + $0x60] sm:$0xff]
    %v387 = vld [vmem:[#allocation10 + $0x68] sm:$0xff]
    %v388 = vld [vmem:[#allocation10 + $0x70] sm:$0xff]
    %v389 = vld [vmem:[#allocation10 + $0x78] sm:$0xff]
    %v390 = vld [vmem:[#allocation10 + $0x80] sm:$0xff]
    %v391 = vld [vmem:[#allocation10 + $0x88] sm:$0xff]
    %v392 = vld [vmem:[#allocation10 + $0x90] sm:$0xff]
    %v393 = vld [vmem:[#allocation10 + $0x98] sm:$0xff]
    %v394 = vld [vmem:[#allocation10 + $0xa0] sm:$0xff]
    %v395 = vld [vmem:[#allocation10 + $0xa8] sm:$0xff]
    %v396 = vld [vmem:[#allocation10 + $0xb0] sm:$0xff]
    %v397 = vld [vmem:[#allocation10 + $0xb8] sm:$0xff]
    %v398 = vld [vmem:[#allocation10 + $0xc0] sm:$0xff]
    %v399 = vld [vmem:[#allocation10 + $0xc8] sm:$0xff]
    %v400 = vld [vmem:[#allocation10 + $0xd0] sm:$0xff]
    %v401 = vld [vmem:[#allocation10 + $0xd8] sm:$0xff]
    %v402 = vld [vmem:[#allocation10 + $0xe0] sm:$0xff]
    %v403 = vld [vmem:[#allocation10 + $0xe8] sm:$0xff]
    %v404 = vld [vmem:[#allocation10 + $0xf0] sm:$0xff]
    %v405 = vld [vmem:[#allocation10 + $0xf8] sm:$0xff]
    %v406 = vld [vmem:[#allocation10 + $0x100] sm:$0xff]
    %v407 = vld [vmem:[#allocation10 + $0x108] sm:$0xff]
    %v408 = vld [vmem:[#allocation10 + $0x110] sm:$0xff]
    %v409 = vld [vmem:[#allocation10 + $0x118] sm:$0xff]
    %v410 = vld [vmem:[#allocation10 + $0x120] sm:$0xff]
    %v411 = vld [vmem:[#allocation10 + $0x128] sm:$0xff]
    %v412 = vld [vmem:[#allocation10 + $0x130] sm:$0xff]
    %v413 = vld [vmem:[#allocation10 + $0x138] sm:$0xff]
    %v414 = vld [vmem:[#allocation10 + $0x140] sm:$0xff]
    %v415 = vld [vmem:[#allocation10 + $0x148] sm:$0xff]
    %v416 = vld [vmem:[#allocation10 + $0x150] sm:$0xff]
    %v417 = vld [vmem:[#allocation10 + $0x158] sm:$0xff]
    %v418 = vld [vmem:[#allocation10 + $0x160] sm:$0xff]
    %v419 = vld [vmem:[#allocation10 + $0x168] sm:$0xff]
    %v420 = vld [vmem:[#allocation10 + $0x170] sm:$0xff]
    %v421 = vld [vmem:[#allocation10 + $0x178] sm:$0xff]
    %v422 = vld [vmem:[#allocation10 + $0x180] sm:$0xff]
    %v423 = vld [vmem:[#allocation10 + $0x188] sm:$0xff]
    %v424 = vld [vmem:[#allocation10 + $0x190] sm:$0xff]
    %v425 = vld [vmem:[#allocation10 + $0x198] sm:$0xff]
    %v426 = vld [vmem:[#allocation10 + $0x1a0] sm:$0xff]
    %v427 = vld [vmem:[#allocation10 + $0x1a8] sm:$0xff]
    %v428 = vld [vmem:[#allocation10 + $0x1b0] sm:$0xff]
    %v429 = vld [vmem:[#allocation10 + $0x1b8] sm:$0xff]
    %v430 = vld [vmem:[#allocation10 + $0x1c0] sm:$0xff]
    %v431 = vld [vmem:[#allocation10 + $0x1c8] sm:$0xff]
    %v432 = vld [vmem:[#allocation10 + $0x1d0] sm:$0xff]
    %v433 = vld [vmem:[#allocation10 + $0x1d8] sm:$0xff]
    %v434 = vld [vmem:[#allocation10 + $0x1e0] sm:$0xff]
    %v435 = vld [vmem:[#allocation10 + $0x1e8] sm:$0xff]
    %v436 = vld [vmem:[#allocation10 + $0x1f0] sm:$0xff]
    %v437 = vld [vmem:[#allocation10 + $0x1f8] sm:$0xff]
    %v438 = vld [vmem:[#allocation10 + $0x200] sm:$0xff]
    %v439 = vld [vmem:[#allocation10 + $0x208] sm:$0xff]
    %v440 = vld [vmem:[#allocation10 + $0x210] sm:$0xff]
    %v441 = vld [vmem:[#allocation10 + $0x218] sm:$0xff]
    %v442 = vld [vmem:[#allocation10 + $0x220] sm:$0xff]
    %v443 = vld [vmem:[#allocation10 + $0x228] sm:$0xff]
    %v444 = vld [vmem:[#allocation10 + $0x230] sm:$0xff]
    %v445 = vld [vmem:[#allocation10 + $0x238] sm:$0xff]
    %v446 = vld [vmem:[#allocation10 + $0x240] sm:$0xff]
    %v447 = vld [vmem:[#allocation10 + $0x248] sm:$0xff]
    %v448 = vld [vmem:[#allocation10 + $0x250] sm:$0xff]
    %v449 = vld [vmem:[#allocation10 + $0x258] sm:$0xff]
    %v450 = vld [vmem:[#allocation10 + $0x260] sm:$0xff]
    %v451 = vld [vmem:[#allocation10 + $0x268] sm:$0xff]
    %v452 = vld [vmem:[#allocation10 + $0x270] sm:$0xff]
    %v453 = vld [vmem:[#allocation10 + $0x278] sm:$0xff]
    %v454 = vld [vmem:[#allocation10 + $0x280] sm:$0xff]
    %v455 = vld [vmem:[#allocation10 + $0x288] sm:$0xff]
    %v456 = vld [vmem:[#allocation10 + $0x290] sm:$0xff]
    %v457 = vld [vmem:[#allocation10 + $0x298] sm:$0xff]
    %v458 = vld [vmem:[#allocation10 + $0x2a0] sm:$0xff]
    %v459 = vld [vmem:[#allocation10 + $0x2a8] sm:$0xff]
    %v460 = vld [vmem:[#allocation10 + $0x2b0] sm:$0xff]
    %v461 = vld [vmem:[#allocation10 + $0x2b8] sm:$0xff]
    %v462 = vld [vmem:[#allocation10 + $0x2c0] sm:$0xff]
    %v463 = vld [vmem:[#allocation10 + $0x2c8] sm:$0xff]
    %v464 = vld [vmem:[#allocation10 + $0x2d0] sm:$0xff]
    %v465 = vld [vmem:[#allocation10 + $0x2d8] sm:$0xff]
    %v466 = vld [vmem:[#allocation10 + $0x2e0] sm:$0xff]
    %v467 = vld [vmem:[#allocation10 + $0x2e8] sm:$0xff]
    %v468 = vld [vmem:[#allocation10 + $0x2f0] sm:$0xff]
    %v469 = vld [vmem:[#allocation10 + $0x2f8] sm:$0xff]
    %v470 = vld [vmem:[#allocation10 + $0x300] sm:$0xff]
    %v471 = vld [vmem:[#allocation10 + $0x308] sm:$0xff]
    %v472 = vld [vmem:[#allocation10 + $0x310] sm:$0xff]
    %v473 = vld [vmem:[#allocation10 + $0x318] sm:$0xff]
    %v474 = vld [vmem:[#allocation10 + $0x320] sm:$0xff]
    %v475 = vld [vmem:[#allocation10 + $0x328] sm:$0xff]
    %v476 = vld [vmem:[#allocation10 + $0x330] sm:$0xff]
    %v477 = vld [vmem:[#allocation10 + $0x338] sm:$0xff]
    %v478 = vld [vmem:[#allocation10 + $0x340] sm:$0xff]
    %v479 = vld [vmem:[#allocation10 + $0x348] sm:$0xff]
    %v480 = vld [vmem:[#allocation10 + $0x350] sm:$0xff]
    %v481 = vld [vmem:[#allocation10 + $0x358] sm:$0xff]
    %v482 = vld [vmem:[#allocation10 + $0x360] sm:$0xff]
    %v483 = vld [vmem:[#allocation10 + $0x368] sm:$0xff]
    %v484 = vld [vmem:[#allocation10 + $0x370] sm:$0xff]
    %v485 = vld [vmem:[#allocation10 + $0x378] sm:$0xff]
    %v486 = vld [vmem:[#allocation10 + $0x380] sm:$0xff]
    %v487 = vld [vmem:[#allocation10 + $0x388] sm:$0xff]
    %v488 = vld [vmem:[#allocation10 + $0x390] sm:$0xff]
    %v489 = vld [vmem:[#allocation10 + $0x398] sm:$0xff]
    %v490 = vld [vmem:[#allocation10 + $0x3a0] sm:$0xff]
    %v491 = vld [vmem:[#allocation10 + $0x3a8] sm:$0xff]
    %v492 = vld [vmem:[#allocation10 + $0x3b0] sm:$0xff]
    %v493 = vld [vmem:[#allocation10 + $0x3b8] sm:$0xff]
    %v494 = vld [vmem:[#allocation10 + $0x3c0] sm:$0xff]
    %v495 = vld [vmem:[#allocation10 + $0x3c8] sm:$0xff]
    %v496 = vld [vmem:[#allocation10 + $0x3d0] sm:$0xff]
    %v497 = vld [vmem:[#allocation10 + $0x3d8] sm:$0xff]
    %v498 = vld [vmem:[#allocation10 + $0x3e0] sm:$0xff]
    %v499 = vld [vmem:[#allocation10 + $0x3e8] sm:$0xff]
    %v500 = vld [vmem:[#allocation10 + $0x3f0] sm:$0xff]
    %v501 = vld [vmem:[#allocation10 + $0x3f8] sm:$0xff]
    %v502 = vld [vmem:[#allocation10 + $0x400] sm:$0xff]
    %v503 = vld [vmem:[#allocation10 + $0x408] sm:$0xff]
    %v504 = vld [vmem:[#allocation10 + $0x410] sm:$0xff]
    %v505 = vld [vmem:[#allocation10 + $0x418] sm:$0xff]
    %v506 = vld [vmem:[#allocation10 + $0x420] sm:$0xff]
    %v507 = vld [vmem:[#allocation10 + $0x428] sm:$0xff]
    %v508 = vld [vmem:[#allocation10 + $0x430] sm:$0xff]
    %v509 = vld [vmem:[#allocation10 + $0x438] sm:$0xff]
    %v510 = vld [vmem:[#allocation10 + $0x440] sm:$0xff]
    %v511 = vld [vmem:[#allocation10 + $0x448] sm:$0xff]
    %v512 = vld [vmem:[#allocation10 + $0x450] sm:$0xff]
    %v513 = vld [vmem:[#allocation10 + $0x458] sm:$0xff]
    %v514 = vld [vmem:[#allocation10 + $0x460] sm:$0xff]
    %v515 = vld [vmem:[#allocation10 + $0x468] sm:$0xff]
    %v516 = vld [vmem:[#allocation10 + $0x470] sm:$0xff]
    %v517 = vld [vmem:[#allocation10 + $0x478] sm:$0xff]
    %v518 = vld [vmem:[#allocation10 + $0x480] sm:$0xff]
    %v519 = vld [vmem:[#allocation10 + $0x488] sm:$0xff]
    %v520 = vld [vmem:[#allocation10 + $0x490] sm:$0xff]
    %v521 = vld [vmem:[#allocation10 + $0x498] sm:$0xff]
    %v522 = vld [vmem:[#allocation10 + $0x4a0] sm:$0xff]
    %v523 = vld [vmem:[#allocation10 + $0x4a8] sm:$0xff]
    %v524 = vld [vmem:[%s6] sm:$0x7]
    %v526 = vlaneseq
    %v527 = vshrl.u32 %v526, 7
    %v528 = vsub.s32 0, %v527
    %v529 = vrot.slane %v524, %v528
    %v530 = vlaneseq
    %v531 = vshrl.u32 %v530, 7
    %v532 = vsub.s32 1, %v531
    %v533 = vrot.slane %v524, %v532
    %v534 = vlaneseq
    %v535 = vshrl.u32 %v534, 7
    %v536 = vsub.s32 2, %v535
    %v537 = vrot.slane %v524, %v536
    %v542 = vsel %vm290, %v373, 0
    %544 = vmatprep.subr.mxu0 %v420
    %545 = vmatpush1.msra.mxu0 %v419
    %546 = vmatprep.subr.mxu0 %v417
    %547 = vmatpush1.msra.mxu0 %v416
    %548 = vmatprep.subr.mxu0 %v414
    %549 = vmatpush1.msra.mxu0 %v413
    %550 = vmatprep.subr.mxu0 %v411
    %551 = vmatpush1.msra.mxu0 %v410
    %552 = vmatprep.subr.mxu0 %v408
    %553 = vmatpush1.msra.mxu0 %v407
    %554 = vmatprep.subr.mxu0 %v405
    %555 = vmatpush1.msra.mxu0 %v404
    %556 = vmatprep.subr.mxu0 %v402
    %557 = vmatpush1.msra.mxu0 %v401
    %558 = vmatprep.subr.mxu0 %v399
    %559 = vmatpush1.msra.mxu0 %v398
    %560 = vmatprep.subr.mxu0 %v396
    %561 = vmatpush1.msra.mxu0 %v395
    %562 = vmatprep.subr.mxu0 %v393
    %563 = vmatpush1.msra.mxu0 %v392
    %564 = vmatprep.subr.mxu0 %v390
    %565 = vmatpush1.msra.mxu0 %v389
    %566 = vmatprep.subr.mxu0 %v387
    %567 = vmatpush1.msra.mxu0 %v386
    %568 = vmatprep.subr.mxu0 %v384
    %569 = vmatpush1.msra.mxu0 %v383
    %570 = vmatprep.subr.mxu0 %v381
    %571 = vmatpush1.msra.mxu0 %v380
    %572 = vmatprep.subr.mxu0 %v378
    %573 = vmatpush1.msra.mxu0 %v377
    %574 = vmatprep.subr.mxu0 %v375
    %575 = vmatpush1.msra.mxu0 %v374
    %576 = vmatprep.subr.mxu0 %v468
    %577 = vmatpush2.msra.mxu0 %v467
    %578 = vmatprep.subr.mxu0 %v465
    %579 = vmatpush2.msra.mxu0 %v464
    %580 = vmatprep.subr.mxu0 %v462
    %581 = vmatpush2.msra.mxu0 %v461
    %582 = vmatprep.subr.mxu0 %v459
    %583 = vmatpush2.msra.mxu0 %v458
    %584 = vmatprep.subr.mxu0 %v456
    %585 = vmatpush2.msra.mxu0 %v455
    %586 = vmatprep.subr.mxu0 %v453
    %587 = vmatpush2.msra.mxu0 %v452
    %588 = vmatprep.subr.mxu0 %v450
    %589 = vmatpush2.msra.mxu0 %v449
    %590 = vmatprep.subr.mxu0 %v447
    %591 = vmatpush2.msra.mxu0 %v446
    %592 = vmatprep.subr.mxu0 %v444
    %593 = vmatpush2.msra.mxu0 %v443
    %594 = vmatprep.subr.mxu0 %v441
    %595 = vmatpush2.msra.mxu0 %v440
    %596 = vmatprep.subr.mxu0 %v438
    %597 = vmatpush2.msra.mxu0 %v437
    %598 = vmatprep.subr.mxu0 %v435
    %599 = vmatpush2.msra.mxu0 %v434
    %600 = vmatprep.subr.mxu0 %v432
    %601 = vmatpush2.msra.mxu0 %v431
    %602 = vmatprep.subr.mxu0 %v429
    %603 = vmatpush2.msra.mxu0 %v428
    %604 = vmatprep.subr.mxu0 %v426
    %605 = vmatpush2.msra.mxu0 %v425
    %606 = vmatprep.subr.mxu0 %v423
    %607 = vmatpush2.msra.mxu0 %v422
    %608 = vmatprep.mubr.f32.mxu0 %v371
    %609 = vmatmul.mubr.f32.gmra.mxu0 %v370
    %v610 = vpop.f32.mrf.mxu0
    %v611 = vadd.f32 %v529, %v610
    %v612 = vpop.f32.mrf.mxu0
    %v613 = vadd.f32 %v533, %v612
    %614 = vdwg.mxu0
    %615 = vmatprep.subr.mxu0 %v516
    %616 = vmatpush1.msra.mxu0 %v515
    %617 = vmatprep.subr.mxu0 %v513
    %618 = vmatpush1.msra.mxu0 %v512
    %619 = vmatprep.subr.mxu0 %v510
    %620 = vmatpush1.msra.mxu0 %v509
    %621 = vmatprep.subr.mxu0 %v507
    %622 = vmatpush1.msra.mxu0 %v506
    %623 = vmatprep.subr.mxu0 %v504
    %624 = vmatpush1.msra.mxu0 %v503
    %625 = vmatprep.subr.mxu0 %v501
    %626 = vmatpush1.msra.mxu0 %v500
    %627 = vmatprep.subr.mxu0 %v498
    %628 = vmatpush1.msra.mxu0 %v497
    %629 = vmatprep.subr.mxu0 %v495
    %630 = vmatpush1.msra.mxu0 %v494
    %631 = vmatprep.subr.mxu0 %v492
    %632 = vmatpush1.msra.mxu0 %v491
    %633 = vmatprep.subr.mxu0 %v489
    %634 = vmatpush1.msra.mxu0 %v488
    %635 = vmatprep.subr.mxu0 %v486
    %636 = vmatpush1.msra.mxu0 %v485
    %637 = vmatprep.subr.mxu0 %v483
    %638 = vmatpush1.msra.mxu0 %v482
    %639 = vmatprep.subr.mxu0 %v480
    %640 = vmatpush1.msra.mxu0 %v479
    %641 = vmatprep.subr.mxu0 %v477
    %642 = vmatpush1.msra.mxu0 %v476
    %643 = vmatprep.subr.mxu0 %v474
    %644 = vmatpush1.msra.mxu0 %v473
    %645 = vmatprep.subr.mxu0 %v471
    %646 = vmatpush1.msra.mxu0 %v470
    %647 = vmatprep.subr.mxu0 0.0
    %648 = vmatpush2.msra.mxu0 0.0
    %649 = vmatprep.subr.mxu0 0.0
    %650 = vmatpush2.msra.mxu0 0.0
    %651 = vmatprep.subr.mxu0 0.0
    %652 = vmatpush2.msra.mxu0 0.0
    %653 = vmatprep.subr.mxu0 0.0
    %654 = vmatpush2.msra.mxu0 0.0
    %655 = vmatprep.subr.mxu0 0.0
    %656 = vmatpush2.msra.mxu0 0.0
    %657 = vmatprep.subr.mxu0 0.0
    %658 = vmatpush2.msra.mxu0 0.0
    %659 = vmatprep.subr.mxu0 0.0
    %660 = vmatpush2.msra.mxu0 0.0
    %661 = vmatprep.subr.mxu0 0.0
    %662 = vmatpush2.msra.mxu0 0.0
    %663 = vmatprep.subr.mxu0 0.0
    %664 = vmatpush2.msra.mxu0 0.0
    %665 = vmatprep.subr.mxu0 0.0
    %666 = vmatpush2.msra.mxu0 0.0
    %667 = vmatprep.subr.mxu0 0.0
    %668 = vmatpush2.msra.mxu0 0.0
    %669 = vmatprep.subr.mxu0 0.0
    %670 = vmatpush2.msra.mxu0 0.0
    %671 = vmatprep.subr.mxu0 0.0
    %672 = vmatpush2.msra.mxu0 0.0
    %673 = vmatprep.subr.mxu0 0.0
    %674 = vmatpush2.msra.mxu0 0.0
    %675 = vmatprep.subr.mxu0 %v522
    %676 = vmatpush2.msra.mxu0 %v521
    %677 = vmatprep.subr.mxu0 %v519
    %678 = vmatpush2.msra.mxu0 %v518
    %679 = vmatprep.mubr.f32.mxu0 %v542
    %680 = vmatmul.mubr.f32.gmra.mxu0 %v372
    %v681 = vpop.f32.mrf.mxu0
    %v682 = vadd.f32 %v611, %v681
    %v683 = vpop.f32.mrf.mxu0
    %v684 = vadd.f32 %v613, %v683
    %685 = vdwg.mxu0
    %686 = vmatprep.subr.mxu0 0.0
    %687 = vmatpush1.msra.mxu0 %v421
    %688 = vmatprep.subr.mxu0 0.0
    %689 = vmatpush1.msra.mxu0 %v418
    %690 = vmatprep.subr.mxu0 0.0
    %691 = vmatpush1.msra.mxu0 %v415
    %692 = vmatprep.subr.mxu0 0.0
    %693 = vmatpush1.msra.mxu0 %v412
    %694 = vmatprep.subr.mxu0 0.0
    %695 = vmatpush1.msra.mxu0 %v409
    %696 = vmatprep.subr.mxu0 0.0
    %697 = vmatpush1.msra.mxu0 %v406
    %698 = vmatprep.subr.mxu0 0.0
    %699 = vmatpush1.msra.mxu0 %v403
    %700 = vmatprep.subr.mxu0 0.0
    %701 = vmatpush1.msra.mxu0 %v400
    %702 = vmatprep.subr.mxu0 0.0
    %703 = vmatpush1.msra.mxu0 %v397
    %704 = vmatprep.subr.mxu0 0.0
    %705 = vmatpush1.msra.mxu0 %v394
    %706 = vmatprep.subr.mxu0 0.0
    %707 = vmatpush1.msra.mxu0 %v391
    %708 = vmatprep.subr.mxu0 0.0
    %709 = vmatpush1.msra.mxu0 %v388
    %710 = vmatprep.subr.mxu0 0.0
    %711 = vmatpush1.msra.mxu0 %v385
    %712 = vmatprep.subr.mxu0 0.0
    %713 = vmatpush1.msra.mxu0 %v382
    %714 = vmatprep.subr.mxu0 0.0
    %715 = vmatpush1.msra.mxu0 %v379
    %716 = vmatprep.subr.mxu0 0.0
    %717 = vmatpush1.msra.mxu0 %v376
    %718 = vmatprep.subr.mxu0 0.0
    %719 = vmatpush2.msra.mxu0 %v469
    %720 = vmatprep.subr.mxu0 0.0
    %721 = vmatpush2.msra.mxu0 %v466
    %722 = vmatprep.subr.mxu0 0.0
    %723 = vmatpush2.msra.mxu0 %v463
    %724 = vmatprep.subr.mxu0 0.0
    %725 = vmatpush2.msra.mxu0 %v460
    %726 = vmatprep.subr.mxu0 0.0
    %727 = vmatpush2.msra.mxu0 %v457
    %728 = vmatprep.subr.mxu0 0.0
    %729 = vmatpush2.msra.mxu0 %v454
    %730 = vmatprep.subr.mxu0 0.0
    %731 = vmatpush2.msra.mxu0 %v451
    %732 = vmatprep.subr.mxu0 0.0
    %733 = vmatpush2.msra.mxu0 %v448
    %734 = vmatprep.subr.mxu0 0.0
    %735 = vmatpush2.msra.mxu0 %v445
    %736 = vmatprep.subr.mxu0 0.0
    %737 = vmatpush2.msra.mxu0 %v442
    %738 = vmatprep.subr.mxu0 0.0
    %739 = vmatpush2.msra.mxu0 %v439
    %740 = vmatprep.subr.mxu0 0.0
    %741 = vmatpush2.msra.mxu0 %v436
    %742 = vmatprep.subr.mxu0 0.0
    %743 = vmatpush2.msra.mxu0 %v433
    %744 = vmatprep.subr.mxu0 0.0
    %745 = vmatpush2.msra.mxu0 %v430
    %746 = vmatprep.subr.mxu0 0.0
    %747 = vmatpush2.msra.mxu0 %v427
    %748 = vmatprep.subr.mxu0 0.0
    %749 = vmatpush2.msra.mxu0 %v424
    %750 = vmatprep.mubr.f32.mxu0 %v371
    %751 = vmatmul.mubr.f32.gmra.mxu0 %v370
    %v752 = vpop.f32.mrf.mxu0
    %v753 = vadd.f32 %v537, %v752
    %v754 = vpop.f32.mrf.mxu0
    %755 = vdwg.mxu0
    %756 = vmatprep.subr.mxu0 0.0
    %757 = vmatpush1.msra.mxu0 %v517
    %758 = vmatprep.subr.mxu0 0.0
    %759 = vmatpush1.msra.mxu0 %v514
    %760 = vmatprep.subr.mxu0 0.0
    %761 = vmatpush1.msra.mxu0 %v511
    %762 = vmatprep.subr.mxu0 0.0
    %763 = vmatpush1.msra.mxu0 %v508
    %764 = vmatprep.subr.mxu0 0.0
    %765 = vmatpush1.msra.mxu0 %v505
    %766 = vmatprep.subr.mxu0 0.0
    %767 = vmatpush1.msra.mxu0 %v502
    %768 = vmatprep.subr.mxu0 0.0
    %769 = vmatpush1.msra.mxu0 %v499
    %770 = vmatprep.subr.mxu0 0.0
    %771 = vmatpush1.msra.mxu0 %v496
    %772 = vmatprep.subr.mxu0 0.0
    %773 = vmatpush1.msra.mxu0 %v493
    %774 = vmatprep.subr.mxu0 0.0
    %775 = vmatpush1.msra.mxu0 %v490
    %776 = vmatprep.subr.mxu0 0.0
    %777 = vmatpush1.msra.mxu0 %v487
    %778 = vmatprep.subr.mxu0 0.0
    %779 = vmatpush1.msra.mxu0 %v484
    %780 = vmatprep.subr.mxu0 0.0
    %781 = vmatpush1.msra.mxu0 %v481
    %782 = vmatprep.subr.mxu0 0.0
    %783 = vmatpush1.msra.mxu0 %v478
    %784 = vmatprep.subr.mxu0 0.0
    %785 = vmatpush1.msra.mxu0 %v475
    %786 = vmatprep.subr.mxu0 0.0
    %787 = vmatpush1.msra.mxu0 %v472
    %788 = vmatprep.subr.mxu0 0.0
    %789 = vmatpush2.msra.mxu0 0.0
    %790 = vmatprep.subr.mxu0 0.0
    %791 = vmatpush2.msra.mxu0 0.0
    %792 = vmatprep.subr.mxu0 0.0
    %793 = vmatpush2.msra.mxu0 0.0
    %794 = vmatprep.subr.mxu0 0.0
    %795 = vmatpush2.msra.mxu0 0.0
    %796 = vmatprep.subr.mxu0 0.0
    %797 = vmatpush2.msra.mxu0 0.0
    %798 = vmatprep.subr.mxu0 0.0
    %799 = vmatpush2.msra.mxu0 0.0
    %800 = vmatprep.subr.mxu0 0.0
    %801 = vmatpush2.msra.mxu0 0.0
    %802 = vmatprep.subr.mxu0 0.0
    %803 = vmatpush2.msra.mxu0 0.0
    %804 = vmatprep.subr.mxu0 0.0
    %805 = vmatpush2.msra.mxu0 0.0
    %806 = vmatprep.subr.mxu0 0.0
    %807 = vmatpush2.msra.mxu0 0.0
    %808 = vmatprep.subr.mxu0 0.0
    %809 = vmatpush2.msra.mxu0 0.0
    %810 = vmatprep.subr.mxu0 0.0
    %811 = vmatpush2.msra.mxu0 0.0
    %812 = vmatprep.subr.mxu0 0.0
    %813 = vmatpush2.msra.mxu0 0.0
    %814 = vmatprep.subr.mxu0 0.0
    %815 = vmatpush2.msra.mxu0 0.0
    %816 = vmatprep.subr.mxu0 0.0
    %817 = vmatpush2.msra.mxu0 %v523
    %818 = vmatprep.subr.mxu0 0.0
    %819 = vmatpush2.msra.mxu0 %v520
    %820 = vmatprep.mubr.f32.mxu0 %v542
    %821 = vmatmul.mubr.f32.gmra.mxu0 %v372
    %v822 = vpop.f32.mrf.mxu0
    %v823 = vadd.f32 %v753, %v822
    %v824 = vpop.f32.mrf.mxu0
    %825 = vdwg.mxu0
    %v826 = vld [vmem:[%s7] sm:$0x7]
    %v827 = vld [vmem:[%s8] sm:$0x7]
    %v828 = vadd.f32 %v682, %v684
    %vm829 = vcmask 359424
    %v830 = vsel %vm829, %v823, 0.0
    %v831 = vadd.f32 %v828, %v830
    %832 = vadd.xlane.f32.xlu0 %v831
    %v833 = vpop.xlane.xlu0 %832
    %v834 = vrcp.pop 300.0
    %v835 = vmul.f32 %v833, %v834
    %v836 = vmul.f32 %v682, %v682
    %v837 = vmul.f32 %v684, %v684
    %v838 = vmul.f32 %v823, %v823
    %v839 = vadd.f32 %v836, %v837
    %v840 = vsel %vm829, %v838, 0.0
    %v841 = vadd.f32 %v839, %v840
    %842 = vadd.xlane.f32.xlu0 %v841
    %v843 = vpop.xlane.xlu0 %842
    %v844 = vmul.f32 %v843, %v834
    %v845 = vmul.f32 %v835, %v835
    %v846 = vsub.f32 %v844, %v845
    %v847 = vsub.f32 %v682, %v835
    %v848 = vsub.f32 %v684, %v835
    %v849 = vsub.f32 %v823, %v835
    %v850 = vadd.f32 %v846, 1e-05
    %v851 = vrsqrt.pop %v850
    %v852 = vmul.f32 %v847, %v851
    %v853 = vmul.f32 %v848, %v851
    %v854 = vmul.f32 %v849, %v851
    %v856 = vlaneseq
    %v857 = vshrl.u32 %v856, 7
    %v858 = vsub.s32 0, %v857
    %v859 = vrot.slane %v826, %v858
    %v860 = vlaneseq
    %v861 = vshrl.u32 %v860, 7
    %v862 = vsub.s32 1, %v861
    %v863 = vrot.slane %v826, %v862
    %v864 = vlaneseq
    %v865 = vshrl.u32 %v864, 7
    %v866 = vsub.s32 2, %v865
    %v867 = vrot.slane %v826, %v866
    %v871 = vmul.f32 %v852, %v859
    %v872 = vmul.f32 %v853, %v863
    %v873 = vmul.f32 %v854, %v867
    %v875 = vlaneseq
    %v876 = vshrl.u32 %v875, 7
    %v877 = vsub.s32 0, %v876
    %v878 = vrot.slane %v827, %v877
    %v879 = vlaneseq
    %v880 = vshrl.u32 %v879, 7
    %v881 = vsub.s32 1, %v880
    %v882 = vrot.slane %v827, %v881
    %v883 = vlaneseq
    %v884 = vshrl.u32 %v883, 7
    %v885 = vsub.s32 2, %v884
    %v886 = vrot.slane %v827, %v885
    %v890 = vadd.f32 %v871, %v878
    %v891 = vadd.f32 %v872, %v882
    %v892 = vadd.f32 %v873, %v886
    %v893 = vmax.f32 %v890, 0.0
    %v894 = vmax.f32 %v891, 0.0
    %v895 = vmax.f32 %v892, 0.0
    %v896 = vld [vmem:[#allocation11] sm:$0xff]
    %v897 = vld [vmem:[#allocation11 + $0x8] sm:$0xff]
    %v898 = vld [vmem:[#allocation11 + $0x10] sm:$0xff]
    %v899 = vld [vmem:[#allocation11 + $0x18] sm:$0xff]
    %v900 = vld [vmem:[#allocation11 + $0x20] sm:$0xff]
    %v901 = vld [vmem:[#allocation11 + $0x28] sm:$0xff]
    %v902 = vld [vmem:[#allocation11 + $0x30] sm:$0xff]
    %v903 = vld [vmem:[#allocation11 + $0x38] sm:$0xff]
    %v904 = vld [vmem:[#allocation11 + $0x40] sm:$0xff]
    %v905 = vld [vmem:[#allocation11 + $0x48] sm:$0xff]
    %v906 = vld [vmem:[#allocation11 + $0x50] sm:$0xff]
    %v907 = vld [vmem:[#allocation11 + $0x58] sm:$0xff]
    %v908 = vld [vmem:[#allocation11 + $0x60] sm:$0xff]
    %v909 = vld [vmem:[#allocation11 + $0x68] sm:$0xff]
    %v910 = vld [vmem:[#allocation11 + $0x70] sm:$0xff]
    %v911 = vld [vmem:[#allocation11 + $0x78] sm:$0xff]
    %v912 = vld [vmem:[#allocation11 + $0x80] sm:$0xff]
    %v913 = vld [vmem:[#allocation11 + $0x88] sm:$0xff]
    %v914 = vld [vmem:[#allocation11 + $0x90] sm:$0xff]
    %v915 = vld [vmem:[#allocation11 + $0x98] sm:$0xff]
    %v916 = vld [vmem:[#allocation11 + $0xa0] sm:$0xff]
    %v917 = vld [vmem:[#allocation11 + $0xa8] sm:$0xff]
    %v918 = vld [vmem:[#allocation11 + $0xb0] sm:$0xff]
    %v919 = vld [vmem:[#allocation11 + $0xb8] sm:$0xff]
    %v920 = vld [vmem:[#allocation11 + $0xc0] sm:$0xff]
    %v921 = vld [vmem:[#allocation11 + $0xc8] sm:$0xff]
    %v922 = vld [vmem:[#allocation11 + $0xd0] sm:$0xff]
    %v923 = vld [vmem:[#allocation11 + $0xd8] sm:$0xff]
    %v924 = vld [vmem:[#allocation11 + $0xe0] sm:$0xff]
    %v925 = vld [vmem:[#allocation11 + $0xe8] sm:$0xff]
    %v926 = vld [vmem:[#allocation11 + $0xf0] sm:$0xff]
    %v927 = vld [vmem:[#allocation11 + $0xf8] sm:$0xff]
    %v928 = vld [vmem:[#allocation11 + $0x100] sm:$0xff]
    %v929 = vld [vmem:[#allocation11 + $0x108] sm:$0xff]
    %v930 = vld [vmem:[#allocation11 + $0x110] sm:$0xff]
    %v931 = vld [vmem:[#allocation11 + $0x118] sm:$0xff]
    %v932 = vld [vmem:[#allocation11 + $0x120] sm:$0xff]
    %v933 = vld [vmem:[#allocation11 + $0x128] sm:$0xf]
    %v934 = vld [vmem:[%s10] sm:$0x1]
    %v936 = vlaneseq
    %v937 = vshrl.u32 %v936, 7
    %v938 = vsub.s32 0, %v937
    %v939 = vrot.slane %v934, %v938
    %v942 = vsel %vm829, %v895, 0
    %vm944 = vcmask 1043456
    %v946 = vsel %vm944, %v933, 0
    %948 = vmatprep.subr.mxu0 0.0
    %949 = vmatpush1.msra.mxu0 %v911
    %950 = vmatprep.subr.mxu0 0.0
    %951 = vmatpush1.msra.mxu0 %v910
    %952 = vmatprep.subr.mxu0 0.0
    %953 = vmatpush1.msra.mxu0 %v909
    %954 = vmatprep.subr.mxu0 0.0
    %955 = vmatpush1.msra.mxu0 %v908
    %956 = vmatprep.subr.mxu0 0.0
    %957 = vmatpush1.msra.mxu0 %v907
    %958 = vmatprep.subr.mxu0 0.0
    %959 = vmatpush1.msra.mxu0 %v906
    %960 = vmatprep.subr.mxu0 0.0
    %961 = vmatpush1.msra.mxu0 %v905
    %962 = vmatprep.subr.mxu0 0.0
    %963 = vmatpush1.msra.mxu0 %v904
    %964 = vmatprep.subr.mxu0 0.0
    %965 = vmatpush1.msra.mxu0 %v903
    %966 = vmatprep.subr.mxu0 0.0
    %967 = vmatpush1.msra.mxu0 %v902
    %968 = vmatprep.subr.mxu0 0.0
    %969 = vmatpush1.msra.mxu0 %v901
    %970 = vmatprep.subr.mxu0 0.0
    %971 = vmatpush1.msra.mxu0 %v900
    %972 = vmatprep.subr.mxu0 0.0
    %973 = vmatpush1.msra.mxu0 %v899
    %974 = vmatprep.subr.mxu0 0.0
    %975 = vmatpush1.msra.mxu0 %v898
    %976 = vmatprep.subr.mxu0 0.0
    %977 = vmatpush1.msra.mxu0 %v897
    %978 = vmatprep.subr.mxu0 0.0
    %979 = vmatpush1.msra.mxu0 %v896
    %980 = vmatprep.subr.mxu0 0.0
    %981 = vmatpush2.msra.mxu0 %v927
    %982 = vmatprep.subr.mxu0 0.0
    %983 = vmatpush2.msra.mxu0 %v926
    %984 = vmatprep.subr.mxu0 0.0
    %985 = vmatpush2.msra.mxu0 %v925
    %986 = vmatprep.subr.mxu0 0.0
    %987 = vmatpush2.msra.mxu0 %v924
    %988 = vmatprep.subr.mxu0 0.0
    %989 = vmatpush2.msra.mxu0 %v923
    %990 = vmatprep.subr.mxu0 0.0
    %991 = vmatpush2.msra.mxu0 %v922
    %992 = vmatprep.subr.mxu0 0.0
    %993 = vmatpush2.msra.mxu0 %v921
    %994 = vmatprep.subr.mxu0 0.0
    %995 = vmatpush2.msra.mxu0 %v920
    %996 = vmatprep.subr.mxu0 0.0
    %997 = vmatpush2.msra.mxu0 %v919
    %998 = vmatprep.subr.mxu0 0.0
    %999 = vmatpush2.msra.mxu0 %v918
    %1000 = vmatprep.subr.mxu0 0.0
    %1001 = vmatpush2.msra.mxu0 %v917
    %1002 = vmatprep.subr.mxu0 0.0
    %1003 = vmatpush2.msra.mxu0 %v916
    %1004 = vmatprep.subr.mxu0 0.0
    %1005 = vmatpush2.msra.mxu0 %v915
    %1006 = vmatprep.subr.mxu0 0.0
    %1007 = vmatpush2.msra.mxu0 %v914
    %1008 = vmatprep.subr.mxu0 0.0
    %1009 = vmatpush2.msra.mxu0 %v913
    %1010 = vmatprep.subr.mxu0 0.0
    %1011 = vmatpush2.msra.mxu0 %v912
    %1012 = vmatprep.mubr.f32.mxu0 %v894
    %1013 = vmatmul.mubr.f32.gmra.mxu0 %v893
    %v1014 = vpop.f32.mrf.mxu0
    %v1015 = vadd.f32 %v939, %v1014
    %v1016 = vpop.f32.mrf.mxu0
    %1017 = vdwg.mxu0
    %1018 = vmatprep.subr.mxu0 0.0
    %1019 = vmatpush1.msra.mxu0 0.0
    %1020 = vmatprep.subr.mxu0 0.0
    %1021 = vmatpush1.msra.mxu0 0.0
    %1022 = vmatprep.subr.mxu0 0.0
    %1023 = vmatpush1.msra.mxu0 0.0
    %1024 = vmatprep.subr.mxu0 0.0
    %1025 = vmatpush1.msra.mxu0 0.0
    %1026 = vmatprep.subr.mxu0 0.0
    %1027 = vmatpush1.msra.mxu0 0.0
    %1028 = vmatprep.subr.mxu0 0.0
    %1029 = vmatpush1.msra.mxu0 0.0
    %1030 = vmatprep.subr.mxu0 0.0
    %1031 = vmatpush1.msra.mxu0 0.0
    %1032 = vmatprep.subr.mxu0 0.0
    %1033 = vmatpush1.msra.mxu0 0.0
    %1034 = vmatprep.subr.mxu0 0.0
    %1035 = vmatpush1.msra.mxu0 0.0
    %1036 = vmatprep.subr.mxu0 0.0
    %1037 = vmatpush1.msra.mxu0 0.0
    %1038 = vmatprep.subr.mxu0 0.0
    %1039 = vmatpush1.msra.mxu0 %v946
    %1040 = vmatprep.subr.mxu0 0.0
    %1041 = vmatpush1.msra.mxu0 %v932
    %1042 = vmatprep.subr.mxu0 0.0
    %1043 = vmatpush1.msra.mxu0 %v931
    %1044 = vmatprep.subr.mxu0 0.0
    %1045 = vmatpush1.msra.mxu0 %v930
    %1046 = vmatprep.subr.mxu0 0.0
    %1047 = vmatpush1.msra.mxu0 %v929
    %1048 = vmatprep.subr.mxu0 0.0
    %1049 = vmatpush1.msra.mxu0 %v928
    %1050 = vmatprep.subr.mxu0 0.0
    %1051 = vmatpush2.msra.mxu0 0.0
    %1052 = vmatprep.subr.mxu0 0.0
    %1053 = vmatpush2.msra.mxu0 0.0
    %1054 = vmatprep.subr.mxu0 0.0
    %1055 = vmatpush2.msra.mxu0 0.0
    %1056 = vmatprep.subr.mxu0 0.0
    %1057 = vmatpush2.msra.mxu0 0.0
    %1058 = vmatprep.subr.mxu0 0.0
    %1059 = vmatpush2.msra.mxu0 0.0
    %1060 = vmatprep.subr.mxu0 0.0
    %1061 = vmatpush2.msra.mxu0 0.0
    %1062 = vmatprep.subr.mxu0 0.0
    %1063 = vmatpush2.msra.mxu0 0.0
    %1064 = vmatprep.subr.mxu0 0.0
    %1065 = vmatpush2.msra.mxu0 0.0
    %1066 = vmatprep.subr.mxu0 0.0
    %1067 = vmatpush2.msra.mxu0 0.0
    %1068 = vmatprep.subr.mxu0 0.0
    %1069 = vmatpush2.msra.mxu0 0.0
    %1070 = vmatprep.subr.mxu0 0.0
    %1071 = vmatpush2.msra.mxu0 0.0
    %1072 = vmatprep.subr.mxu0 0.0
    %1073 = vmatpush2.msra.mxu0 0.0
    %1074 = vmatprep.subr.mxu0 0.0
    %1075 = vmatpush2.msra.mxu0 0.0
    %1076 = vmatprep.subr.mxu0 0.0
    %1077 = vmatpush2.msra.mxu0 0.0
    %1078 = vmatprep.subr.mxu0 0.0
    %1079 = vmatpush2.msra.mxu0 0.0
    %1080 = vmatprep.subr.mxu0 0.0
    %1081 = vmatpush2.msra.mxu0 0.0
    %1082 = vmatprep.mubr.f32.mxu0 0.0
    %1083 = vmatmul.mubr.f32.gmra.mxu0 %v942
    %v1084 = vpop.f32.mrf.mxu0
    %v1085 = vadd.f32 %v1015, %v1084
    %v1086 = vpop.f32.mrf.mxu0
    %1087 = vdwg.mxu0
    %v1088 = vtanh.pop %v1085
    %1089 = vst [vmem:[#allocation13] sm:$0xff] %v1088
    // Predicated region
    $region70: #{tpu_custom_call.1} parent=1 // pred_check
      _
    $region71: #{tpu_custom_call.1} parent=1 // pred_check_branch
      %1091 = sbr.rel (0) target = $region73
    $region72: #{tpu_custom_call.1} parent=1 // pred_region
      %s1093 = ssub.s32 128, 128
      %1094 = vsyncadd [#allocation4], %s1093
      %s1096 = sshll.u32 [#allocation13], 4
      %s1097 = int_to_ptr.vmem [resolvable:$true] %s1096
      %1099 = dma.vmem_to_hbm [thread:$0]  %s1097, 128, %s11, [#allocation4]
    $region73: #{tpu_custom_call.1} parent=1 // pred_fallthru
      _
    // Predicated region
    $region74: #{tpu_custom_call.1} parent=1 // pred_check
      _
    $region75: #{tpu_custom_call.1} parent=1 // pred_check_branch
      %1101 = sbr.rel (0) target = $region77
    $region76: #{tpu_custom_call.1} parent=1 // pred_region
      %1102 = dma.done [#allocation4], 128
    $region77: #{tpu_custom_call.1} parent=1 // pred_fallthru
      _
    %1103 = vsyncpa [#allocation3], 1
    %1104 = vsyncpa [#allocation6], 1
    %1105 = vsyncpa [#allocation9], 1
    %1106 = vsyncpa [#allocation12], 1
    %1107 = vsyncpa [#allocation4], 1

</llo_original>
